<compile_context>
chip_gen: v5e
topology: v5e:2x2
jax: 0.10.0
libtpu: 0.0.40
codegen_flags: <defaults>
</compile_context>

<pallas_src>
import functools

import jax
import jax.numpy as jnp
from jax.experimental import pallas as pl
from jax.experimental.pallas import tpu as pltpu


def _round_up(x, m):
    return -(-x // m) * m


def _loss_kernel(dif_pos_ref, g_pred_ref, dif_y_ref, out_ref, acc_ref, *,
                 b_total, bblk, nblk_inner, total_blocks, ncores, inv_norm):
    c = pl.program_id(0)          # core-split axis ("parallel")
    i = pl.program_id(1)          # batch-block axis ("arbitrary", accumulates)

    @pl.when(i == 0)
    def _():
        acc_ref[...] = jnp.zeros_like(acc_ref)

    dp = dif_pos_ref[...]                      # [BBLK, T, AD]  (native dtype)
    gp = g_pred_ref[...]                       # [BBLK, AD]     (native dtype)
    prod = dp * gp[:, None, :]                 # sublane broadcast, VPU multiply
    # Lane-axis contraction with f32 accumulation.
    # TODO(synk): if profiling on v7x shows the XLU lane-reduce as the binding
    # slot, offload this AD-reduction to the idle MXU via a
    # (BBLK*T, AD) @ (AD, 1) matmul against a resident ones vector.
    s = jnp.sum(prod, axis=2, dtype=jnp.float32)     # [BBLK, T]
    diff = s - dif_y_ref[...]                        # [1, T] broadcasts over sublanes
    sq = diff * diff                                 # [BBLK, T]

    blk = c * nblk_inner + i                   # logical block id (may overhang)

    # Static: is there any ragged tail block or core-split overhang at all?
    any_partial = (b_total % bblk != 0) or (ncores * nblk_inner != total_blocks)

    if not any_partial:
        acc_ref[...] += sq
    else:
        needs_mask = (blk * bblk + bblk) > b_total

        @pl.when(jnp.logical_not(needs_mask))
        def _():
            acc_ref[...] += sq                 # steady-state path: no iota/cmp/select

        @pl.when(needs_mask)
        def _():
            row = blk * bblk + jax.lax.broadcasted_iota(jnp.int32, (bblk, 1), 0)
            acc_ref[...] += jnp.where(row < b_total, sq, jnp.float32(0.0))

    @pl.when(i == nblk_inner - 1)
    def _():
        out_ref[0, 0] = jnp.sum(acc_ref[...]) * jnp.float32(inv_norm)


def my_loss(g_pred, dif_pos, dif_y, *,
            target_block_bytes=4 * 1024 * 1024, ncores=1):
    """Pallas TPU equivalent of my_loss.forward(g_pred, dif_pos, dif_y)."""
    B, T, A, D = dif_pos.shape
    AD = A * D
    assert g_pred.shape == (B * A, D)
    assert dif_y.shape == (T,)

    # Glue: flatten (agents, dim) so the kernel does a lane-axis contraction.
    # Inputs keep their native dtype in HBM; dif_y is a tiny lane-dense row.
    dif_pos_f = dif_pos.reshape(B, T, AD)
    g_pred_f = g_pred.reshape(B, AD)                    # 2-D, lane-dense block
    dif_y_f = dif_y.reshape(1, T).astype(jnp.float32)

    # VMEM-accurate block sizing: lane pad AD->128, sublane pad T->8, and count
    # 4 B/elem (the f32 temporaries dominate even for bf16 input).
    bytes_per_row = _round_up(T, 8) * _round_up(AD, 128) * 4
    bblk = max(1, target_block_bytes // bytes_per_row)
    if bblk >= B:
        bblk = B
    else:
        # Keep the g_pred 2-D block's sublane dim 8-aligned (or equal to B).
        bblk = min(max(8, (bblk // 8) * 8), B)

    total_blocks = pl.cdiv(B, bblk)
    nblk_inner = pl.cdiv(total_blocks, ncores)
    last_block = total_blocks - 1

    # No wrapper-side padding: overhanging block indices are clamped so the DMA
    # stays in bounds; the in-kernel row mask (keyed on the *logical* block id)
    # discards any garbage / duplicated rows.
    def dp_map(c, i):
        return (jnp.minimum(c * nblk_inner + i, last_block), 0, 0)

    def gp_map(c, i):
        return (jnp.minimum(c * nblk_inner + i, last_block), 0)

    kernel = functools.partial(
        _loss_kernel, b_total=B, bblk=bblk, nblk_inner=nblk_inner,
        total_blocks=total_blocks, ncores=ncores, inv_norm=1.0 / (B * T))

    # Explicit VMEM budget: 2x double-buffered dif_pos (counted at f32 size to
    # also cover live f32 temporaries), 2x g_pred, accumulator, headroom.
    dp_blk_bytes = bblk * _round_up(T, 8) * _round_up(AD, 128) * 4
    gp_blk_bytes = _round_up(bblk, 8) * _round_up(AD, 128) * 4
    acc_bytes = _round_up(bblk, 8) * _round_up(T, 128) * 4
    vmem_est = 4 * dp_blk_bytes + 2 * gp_blk_bytes + acc_bytes + (2 << 20)
    vmem_limit = int(min(max(vmem_est, 32 << 20), 60 << 20))

    partials = pl.pallas_call(
        kernel,
        out_shape=jax.ShapeDtypeStruct((ncores, 1), jnp.float32),
        grid_spec=pltpu.PrefetchScalarGridSpec(
            num_scalar_prefetch=0,
            grid=(ncores, nblk_inner),
            in_specs=[
                # dif_pos blocks: [BBLK, T, AD] (last two dims = full array dims)
                pl.BlockSpec((bblk, T, AD), dp_map),
                # matching g_pred rows: 2-D lane-dense [BBLK, AD]
                pl.BlockSpec((bblk, AD), gp_map),
                # dif_y resident across the whole grid
                pl.BlockSpec((1, T), lambda c, i: (0, 0)),
            ],
            out_specs=pl.BlockSpec((1, 1), lambda c, i: (c, 0),
                                   memory_space=pltpu.SMEM),
            scratch_shapes=[pltpu.VMEM((bblk, T), jnp.float32)],
        ),
        compiler_params=pltpu.CompilerParams(
            # TODO(synk): on v7x, if xprof shows only one TensorCore busy with
            # ncores=2, switch the leading axis to pltpu.CORE_PARALLEL.
            dimension_semantics=("parallel", "arbitrary"),
            vmem_limit_bytes=vmem_limit),
    )(dif_pos_f, g_pred_f, dif_y_f)

    return jnp.sum(partials)


def my_loss_ref(g_pred, dif_pos, dif_y):
    """Pure-JAX reference matching the PyTorch loop exactly."""
    B, T, A, D = dif_pos.shape
    loss = 0.0
    for i in range(B):
        s = jnp.sum(dif_pos[i].astype(jnp.float32)
                    * g_pred[A * i:A * i + A].astype(jnp.float32), axis=(1, 2))
        loss = loss + jnp.mean((s - dif_y.astype(jnp.float32)) ** 2)
    return loss / B


if __name__ == "__main__":
    key = jax.random.PRNGKey(0)

    # Test 1: shape consistent with the module (B=2, T=8, A=4, D=16).
    B, T, A, D = 2, 8, 4, 16
    k1, k2, k3, k4, k5, k6, k7, k8, k9 = jax.random.split(key, 9)
    dif_pos = jax.random.normal(k1, (B, T, A, D), dtype=jnp.float32)
    g_pred = jax.random.normal(k2, (B * A, D), dtype=jnp.float32)
    dif_y = jax.random.normal(k3, (T,), dtype=jnp.float32)

    out = jax.block_until_ready(my_loss(g_pred, dif_pos, dif_y))
    ref = jax.block_until_ready(my_loss_ref(g_pred, dif_pos, dif_y))
    assert jnp.allclose(out, ref, rtol=1e-5, atol=1e-5), (out, ref)

    # Test 2: odd batch, single block (bblk == B).
    B2, T2, A2, D2 = 3, 8, 4, 16
    dif_pos2 = jax.random.normal(k4, (B2, T2, A2, D2), dtype=jnp.float32)
    g_pred2 = jax.random.normal(k5, (B2 * A2, D2), dtype=jnp.float32)
    dif_y2 = jax.random.normal(k6, (T2,), dtype=jnp.float32)

    out2 = jax.block_until_ready(my_loss(g_pred2, dif_pos2, dif_y2))
    ref2 = jax.block_until_ready(my_loss_ref(g_pred2, dif_pos2, dif_y2))
    assert jnp.allclose(out2, ref2, rtol=1e-5, atol=1e-5), (out2, ref2)

    # Test 3: forced multi-block tiling with a ragged tail and a 2-way core
    # split (exercises partial-block masking + index clamping, no jnp.pad).
    B3, T3, A3, D3 = 20, 8, 4, 16
    dif_pos3 = jax.random.normal(k7, (B3, T3, A3, D3), dtype=jnp.float32)
    g_pred3 = jax.random.normal(k8, (B3 * A3, D3), dtype=jnp.float32)
    dif_y3 = jax.random.normal(k9, (T3,), dtype=jnp.float32)

    out3 = jax.block_until_ready(
        my_loss(g_pred3, dif_pos3, dif_y3, target_block_bytes=1, ncores=2))
    ref3 = jax.block_until_ready(my_loss_ref(g_pred3, dif_pos3, dif_y3))
    assert jnp.allclose(out3, ref3, rtol=1e-5, atol=1e-5), (out3, ref3)

    print("KERNEL_OK")
</pallas_src>

<mosaic_0001>
module attributes {stable_mosaic.version = 11 : i64} {
  func.func @_loss_kernel(%arg0: i32, %arg1: i32, %arg2: memref<2x8x64xf32, #tpu.memory_space<vmem>>, %arg3: memref<2x64xf32, #tpu.memory_space<vmem>>, %arg4: memref<1x8xf32, #tpu.memory_space<vmem>>, %arg5: memref<1x1xf32, #tpu.memory_space<smem>>, %arg6: memref<2x8xf32, #tpu.memory_space<vmem>>) attributes {dimension_semantics = [#tpu.dimension_semantics<parallel>, #tpu.dimension_semantics<arbitrary>], iteration_bounds = array<i64: 1, 1>, scalar_prefetch = 0 : i64, scratch_operands = 1 : i64, tpu.core_type = #tpu.core_type<tc>, window_params = [{transform_indices = @transform_0, window_bounds = array<i64: 2, 8, 64>}, {transform_indices = @transform_1, window_bounds = array<i64: 2, 64>}, {pipeline_mode = #tpu.pipeline_mode<synchronous>, transform_indices = @transform_2, window_bounds = array<i64: 1, 8>}, {transform_indices = @transform_3, window_bounds = array<i64: 1, 1>}]} {
    %c0_i32 = arith.constant 0 : i32
    %0 = arith.cmpi eq, %arg1, %c0_i32 : i32
    %1 = arith.extui %0 : i1 to i32
    %c0_i32_0 = arith.constant 0 : i32
    %2 = arith.cmpi ne, %1, %c0_i32_0 : i32
    scf.if %2 {
      %cst_13 = arith.constant 0.000000e+00 : f32
      %19 = vector.broadcast %cst_13 : f32 to vector<2x8xf32>
      %c0_14 = arith.constant 0 : index
      %c0_15 = arith.constant 0 : index
      %20 = vector.load %arg6[%c0_14, %c0_15] : memref<2x8xf32, #tpu.memory_space<vmem>>, vector<2x8xf32>
      tpu.vector_store %arg6[%c0_14, %c0_15], %19 {strides = array<i32>} : memref<2x8xf32, #tpu.memory_space<vmem>>, vector<2x8xf32>,
    } else {
    }
    %c0 = arith.constant 0 : index
    %c0_1 = arith.constant 0 : index
    %c0_2 = arith.constant 0 : index
    %3 = vector.load %arg2[%c0, %c0_1, %c0_2] : memref<2x8x64xf32, #tpu.memory_space<vmem>>, vector<2x8x64xf32>
    %c0_3 = arith.constant 0 : index
    %c0_4 = arith.constant 0 : index
    %4 = vector.load %arg3[%c0_3, %c0_4] : memref<2x64xf32, #tpu.memory_space<vmem>>, vector<2x64xf32>
    %5 = vector.shape_cast %4 : vector<2x64xf32> to vector<2x1x64xf32>
    %6 = vector.broadcast %5 : vector<2x1x64xf32> to vector<2x8x64xf32>
    %7 = arith.mulf %3, %6 : vector<2x8x64xf32>
    %cst = arith.constant dense<0.000000e+00> : vector<2x8xf32>
    %8 = vector.multi_reduction <add>, %7, %cst [2] : vector<2x8x64xf32> to vector<2x8xf32>
    %c0_5 = arith.constant 0 : index
    %c0_6 = arith.constant 0 : index
    %9 = vector.load %arg4[%c0_5, %c0_6] : memref<1x8xf32, #tpu.memory_space<vmem>>, vector<1x8xf32>
    %10 = vector.broadcast %9 : vector<1x8xf32> to vector<2x8xf32>
    %11 = arith.subf %8, %10 : vector<2x8xf32>
    %12 = arith.mulf %11, %11 : vector<2x8xf32>
    %c0_7 = arith.constant 0 : index
    %c0_8 = arith.constant 0 : index
    %13 = vector.load %arg6[%c0_7, %c0_8] : memref<2x8xf32, #tpu.memory_space<vmem>>, vector<2x8xf32>
    %14 = arith.addf %13, %12 : vector<2x8xf32>
    %c0_9 = arith.constant 0 : index
    %c0_10 = arith.constant 0 : index
    %15 = vector.load %arg6[%c0_9, %c0_10] : memref<2x8xf32, #tpu.memory_space<vmem>>, vector<2x8xf32>
    tpu.vector_store %arg6[%c0_9, %c0_10], %14 {strides = array<i32>} : memref<2x8xf32, #tpu.memory_space<vmem>>, vector<2x8xf32>,
    %c0_i32_11 = arith.constant 0 : i32
    %16 = arith.cmpi eq, %arg1, %c0_i32_11 : i32
    %17 = arith.extui %16 : i1 to i32
    %c0_i32_12 = arith.constant 0 : i32
    %18 = arith.cmpi ne, %17, %c0_i32_12 : i32
    scf.if %18 {
      %c0_13 = arith.constant 0 : index
      %c0_14 = arith.constant 0 : index
      %19 = vector.load %arg6[%c0_13, %c0_14] : memref<2x8xf32, #tpu.memory_space<vmem>>, vector<2x8xf32>
      %20 = vector.shape_cast %19 : vector<2x8xf32> to vector<1x2x8xf32>
      %cst_15 = arith.constant dense<0.000000e+00> : vector<1xf32>
      %21 = vector.multi_reduction <add>, %20, %cst_15 [1, 2] : vector<1x2x8xf32> to vector<1xf32>
      %22 = vector.shape_cast %21 : vector<1xf32> to vector<1x1x1xf32>
      %23 = vector.extract %22[0, 0, 0] : f32 from vector<1x1x1xf32>
      %cst_16 = arith.constant 6.250000e-02 : f32
      %24 = arith.mulf %23, %cst_16 : f32
      %c0_17 = arith.constant 0 : index
      %c0_18 = arith.constant 0 : index
      %25 = memref.load %arg5[%c0_17, %c0_18] : memref<1x1xf32, #tpu.memory_space<smem>>
      memref.store %24, %arg5[%c0_17, %c0_18] : memref<1x1xf32, #tpu.memory_space<smem>>
    } else {
    }
    return
  }
  func.func @transform_0(%arg0: i32, %arg1: i32) -> (i32, i32, i32) {
    %c1_i32 = arith.constant 1 : i32
    %0 = arith.muli %arg0, %c1_i32 : i32
    %1 = arith.addi %0, %arg1 : i32
    %c0_i32 = arith.constant 0 : i32
    %2 = arith.minsi %1, %c0_i32 : i32
    %c0_i32_0 = arith.constant 0 : i32
    %c0_i32_1 = arith.constant 0 : i32
    %c0_i32_2 = arith.constant 0 : i32
    return %2, %c0_i32_0, %c0_i32_1 : i32, i32, i32
  }
  func.func @transform_1(%arg0: i32, %arg1: i32) -> (i32, i32) {
    %c1_i32 = arith.constant 1 : i32
    %0 = arith.muli %arg0, %c1_i32 : i32
    %1 = arith.addi %0, %arg1 : i32
    %c0_i32 = arith.constant 0 : i32
    %2 = arith.minsi %1, %c0_i32 : i32
    %c0_i32_0 = arith.constant 0 : i32
    %c0_i32_1 = arith.constant 0 : i32
    return %2, %c0_i32_0 : i32, i32
  }
  func.func @transform_2(%arg0: i32, %arg1: i32) -> (i32, i32) {
    %c0_i32 = arith.constant 0 : i32
    %c0_i32_0 = arith.constant 0 : i32
    %c0_i32_1 = arith.constant 0 : i32
    return %c0_i32, %c0_i32_0 : i32, i32
  }
  func.func @transform_3(%arg0: i32, %arg1: i32) -> (i32, i32) {
    %c0_i32 = arith.constant 0 : i32
    %c0_i32_0 = arith.constant 0 : i32
    return %arg0, %c0_i32 : i32, i32
  }
}

</mosaic_0001>

<llo_original>
// kernel: tpu_custom_call.1
$region0: #{tpu_custom_call.1}
  #allocation0 [shape = 'u32[]', space=smem, size = 0x4, offset = 0x4, fixed_abs, tag = 'smem constant byte address 0x4 - core index']
  #allocation1 [shape = 'u32[72,128]{1,0:T(1,128)}', space=vmem, size = 0x9000, scoped, tag = 'internal scratch']
  #allocation2 [shape = 'f32[2,8]{1,0:T(2,128)}', space=vmem, size = 0x400, scoped, tag = 'scratch operand']
  %s0 = inlined_call_operand.hbm [shape: f32[2,8,64], index: 0, kind: input, shape index: {}]
  %s1 = inlined_call_operand.hbm [shape: f32[2,64], index: 1, kind: input, shape index: {}]
  %s2 = inlined_call_operand.vmem [shape: f32[1,8], index: 2, kind: input, shape index: {}]
  %s3 = inlined_call_operand.hbm [shape: f32[1,1], index: 3, kind: output, shape index: {}]
  %s4 = sld [smem:[#allocation0]]
  $region38: #{tpu_custom_call.1} parent=0
    _
  %s6 = ssub.s32 1, %s4
  %s7 = scalar_select 0, %s6, %s4
  $region1: #{tpu_custom_call.1} parent=0
    #allocation3 [shape = 'u8[8192]{0}', space=vmem, size = 0x2000, scoped, tag = 'input window, operand 0, single buffered']
    #allocation4 [shape = 's32[1]{0}', space=sflag, size = 0x4, scoped, tag = 'scoped memory for tpu_custom_call.1']
    #allocation5 [shape = 's32[1]{0}', space=sflag, size = 0x4, scoped, tag = 'scoped memory for tpu_custom_call.1']
    #allocation6 [shape = 'u8[1024]{0}', space=vmem, size = 0x400, scoped, tag = 'input window, operand 1, single buffered']
    #allocation7 [shape = 's32[1]{0}', space=sflag, size = 0x4, scoped, tag = 'scoped memory for tpu_custom_call.1']
    #allocation8 [shape = 'u8[512]{0}', space=smem, size = 0x200, scoped, tag = 'output window, operand 0, single buffered']
    %8 = vsyncpa [#allocation4], 0
    %9 = vsyncpa [#allocation7], 0
    %10 = vsyncpa [#allocation5], 0
    // Predicated region
    $region2: #{tpu_custom_call.1} parent=1 // pred_check
      _
    $region3: #{tpu_custom_call.1} parent=1 // pred_check_branch
      %12 = sbr.rel (0) target = $region5
    $region4: #{tpu_custom_call.1} parent=1 // pred_region
      %s13 = sadd.s32 0, 0
      %p14 = scmp.lt.s32.totalorder %s13, 0
      %s15 = scalar_select %p14, %s13, 0
      %s16 = smul.u32 2, %s15
      %18 = vsyncadd [#allocation4], 0
      %s19 = smul.addr %s16, 8
      %s20 = scalar_lea.hbm %s0, %s19
      %s21 = sshll.u32 %s20, 4
      %s22 = int_to_ptr.hbm [resolvable:$true] %s21
      %s23 = sshll.u32 [#allocation3], 4
      %s24 = int_to_ptr.vmem [resolvable:$true] %s23
      %29 = dma.hbm_to_vmem [thread:$0]  %s22, 256, %s24, [#allocation4], 128, 128, 8
    $region5: #{tpu_custom_call.1} parent=1 // pred_fallthru
      _
    // Predicated region
    $region6: #{tpu_custom_call.1} parent=1 // pred_check
      _
    $region7: #{tpu_custom_call.1} parent=1 // pred_check_branch
      %31 = sbr.rel (0) target = $region9
    $region8: #{tpu_custom_call.1} parent=1 // pred_region
      %s32 = sadd.s32 0, 0
      %p33 = scmp.lt.s32.totalorder %s32, 0
      %s34 = scalar_select %p33, %s32, 0
      %36 = vsyncadd [#allocation7], 0
      %s37 = smul.addr %s34, 2
      %s38 = scalar_lea.hbm %s1, %s37
      %s40 = sshll.u32 %s38, 4
      %s41 = int_to_ptr.hbm [resolvable:$true] %s40
      %s42 = sshll.u32 [#allocation6], 4
      %s43 = int_to_ptr.vmem [resolvable:$true] %s42
      %45 = dma.hbm_to_vmem [thread:$0]  %s41, 32, %s43, [#allocation7]
    $region9: #{tpu_custom_call.1} parent=1 // pred_fallthru
      _
    // Predicated region
    $region10: #{tpu_custom_call.1} parent=1 // pred_check
      _
    $region11: #{tpu_custom_call.1} parent=1 // pred_check_branch
      %47 = sbr.rel (0) target = $region13
    $region12: #{tpu_custom_call.1} parent=1 // pred_region
      _
    $region13: #{tpu_custom_call.1} parent=1 // pred_fallthru
      _
    // Predicated region
    $region14: #{tpu_custom_call.1} parent=1 // pred_check
      _
    $region15: #{tpu_custom_call.1} parent=1 // pred_check_branch
      %49 = sbr.rel (0) target = $region17
    $region16: #{tpu_custom_call.1} parent=1 // pred_region
      %51 = dma.done [#allocation4], 256
    $region17: #{tpu_custom_call.1} parent=1 // pred_fallthru
      _
    // Predicated region
    $region18: #{tpu_custom_call.1} parent=1 // pred_check
      _
    $region19: #{tpu_custom_call.1} parent=1 // pred_check_branch
      %53 = sbr.rel (0) target = $region21
    $region20: #{tpu_custom_call.1} parent=1 // pred_region
      %55 = dma.done [#allocation7], 32
    $region21: #{tpu_custom_call.1} parent=1 // pred_fallthru
      _
    %s56 = sadd.s32 0, 0
    %p57 = scmp.lt.s32.totalorder %s56, 0
    %s58 = scalar_select %p57, %s56, 0
    %s59 = smul.u32 2, %s58
    %s60 = sadd.s32 0, 0
    %p61 = scmp.lt.s32.totalorder %s60, 0
    %s62 = scalar_select %p61, %s60, 0
    %p63 = scmp.eq.s32.totalorder 0, 0
    // Predicated region
    $region22: #{tpu_custom_call.1} parent=1 // pred_check
      %p64 = pneg %p63
    $region23: #{tpu_custom_call.1} parent=1 // pred_check_branch
      %66 = sbr.rel (%p64) target = $region25
    $region24: #{tpu_custom_call.1} parent=1 // pred_region
      %vm67 = vcmask 58368
      %68 = vst.msk [vmem:[#allocation2] sm:$0x3] %vm67, 0.0
    $region25: #{tpu_custom_call.1} parent=1 // pred_fallthru
      _
    %v69 = vld [vmem:[#allocation3] sm:$0xff]
    %v70 = vld [vmem:[#allocation3 + $0x8] sm:$0xff]
    %v71 = vld [vmem:[#allocation6] sm:$0x3]
    %v73 = vrot.slane %v71, 1
    %v74 = vperm.slane %v71, 0
    %v75 = vperm.slane %v73, 0
    %v78 = vmul.f32 %v69, %v74
    %v79 = vmul.f32 %v70, %v75
    %vm80 = vcmask 523264
    %v81 = vsel %vm80, %v78, 0.0
    %82 = vadd.xlane.f32.xlu0 %v81
    %v83 = vpop.xlane.xlu0 %82
    %v84 = vsel %vm80, %v79, 0.0
    %85 = vadd.xlane.f32.xlu0 %v84
    %v86 = vpop.xlane.xlu0 %85
    %v87 = vld [vmem:[%s2] sm:$0x1]
    %v89 = vperm.slane %v87, 0
    %v90 = vlaneseq
    %v91 = vshrl.u32 %v90, 7
    %93 = vset.pattern.permute.xlu0 %v91
    %94 = vperm.xlu0 %93, %v89
    %v95 = vpop.permute.xlu0 %94
    %v97 = vsub.f32 %v83, %v95
    %v98 = vsub.f32 %v86, %v95
    %v99 = vmul.f32 %v97, %v97
    %v100 = vmul.f32 %v98, %v98
    %v101 = vld [vmem:[#allocation2] sm:$0x3]
    %104 = vset.pattern.permute.xlu0 0
    %105 = vperm.xlu0 %104, %v99
    %v106 = vpop.permute.xlu0 %105
    %107 = vset.pattern.permute.xlu0 0
    %108 = vperm.xlu0 %107, %v100
    %v109 = vpop.permute.xlu0 %108
    %v110 = vlaneseq
    %v111 = vand.u32 %v110, 127
    %v112 = vperm.slane %v106, %v111
    %v113 = vperm.slane %v109, %v111
    %vm114 = vcmask 1041409
    %v115 = vsel %vm114, %v113, %v112
    %v117 = vadd.f32 %v101, %v115
    %vm118 = vcmask 58368
    %119 = vst.msk [vmem:[#allocation2] sm:$0x3] %vm118, %v117
    // Predicated region
    $region26: #{tpu_custom_call.1} parent=1 // pred_check
      %p120 = pneg %p63
    $region27: #{tpu_custom_call.1} parent=1 // pred_check_branch
      %122 = sbr.rel (%p120) target = $region29
    $region28: #{tpu_custom_call.1} parent=1 // pred_region
      %v123 = vld [vmem:[#allocation2] sm:$0x3]
      %v124 = vsel %vm118, %v123, 0.0
      %125 = vadd.xlane.f32.xlu0 %v124
      %v126 = vpop.xlane.xlu0 %125
      %v127 = vrot.slane %v126, 4
      %v128 = vadd.f32 %v126, %v127
      %v129 = vrot.slane %v128, 2
      %v130 = vadd.f32 %v128, %v129
      %v131 = vrot.slane %v130, 1
      %v132 = vadd.f32 %v130, %v131
      %s133 = vtos %v132
      %s134 = smul.f32 %s133, 0.0625
      %s135 = scalar_lea.smem [#allocation8], 0
      %136 = sst [smem:[%s135]] %s134
    $region29: #{tpu_custom_call.1} parent=1 // pred_fallthru
      _
    // Predicated region
    $region30: #{tpu_custom_call.1} parent=1 // pred_check
      _
    $region31: #{tpu_custom_call.1} parent=1 // pred_check_branch
      %138 = sbr.rel (0) target = $region33
    $region32: #{tpu_custom_call.1} parent=1 // pred_region
      %140 = vsyncadd [#allocation5], 0
      %s142 = sshll.u32 %s3, 4
      %s143 = int_to_ptr.hbm [resolvable:$true] %s142
      %145 = dma.smem_to_hbm [#allocation8], 16, %s143, [#allocation5]
    $region33: #{tpu_custom_call.1} parent=1 // pred_fallthru
      _
    // Predicated region
    $region34: #{tpu_custom_call.1} parent=1 // pred_check
      _
    $region35: #{tpu_custom_call.1} parent=1 // pred_check_branch
      %147 = sbr.rel (0) target = $region37
    $region36: #{tpu_custom_call.1} parent=1 // pred_region
      %149 = dma.done [#allocation5], 16
    $region37: #{tpu_custom_call.1} parent=1 // pred_fallthru
      _
    %150 = sfence
    %151 = vsyncpa [#allocation4], 1
    %152 = vsyncpa [#allocation7], 1
    %153 = vsyncpa [#allocation5], 1

</llo_original>
